<compile_context>
chip_gen: v7x
topology: tpu7x:2x2x1
jax: 0.10.0
libtpu: 0.0.40
codegen_flags: <defaults>
</compile_context>

<pallas_src>
import functools

import jax
import jax.numpy as jnp
from jax import lax
from jax.experimental import pallas as pl
from jax.experimental.pallas import tpu as pltpu


def _round_up(n, m):
    return ((n + m - 1) // m) * m


# ----------------------------------------------------------------------------
# Kernel 1: fused feature-extractor + spectral projection, streamed over N.
#   out[s](K, C) = sum_chunks  evecs_k^T @ (mass * MLP(xyz))     (per shape s)
# All streamed operands arrive pre-packed / pre-cast to bf16; weights arrive
# transposed and pre-cast to bf16 (w1t has a zero column for the mass row).
# ----------------------------------------------------------------------------
def spectral_proj_kernel(pk_ref, w1t_ref, b1_ref, w2t_ref, b2_ref, out_ref):
    K = out_ref.shape[0]
    cin1 = w1t_ref.shape[1]          # C_in + 1 (mass row folded, zero weight)

    @pl.when(pl.program_id(1) == 0)
    def _init():
        out_ref[...] = jnp.zeros_like(out_ref)

    evT = pk_ref[0:K, :]                                     # (K, T) bf16
    xm = pk_ref[K:K + cin1, :]                               # (C_in+1, T) bf16
    mT = pk_ref[K + cin1 - 1:K + cin1, :].astype(jnp.float32)  # (1, T)

    # transposed MLP: natural MXU matmuls, f32 accumulation / elementwise
    h = jnp.dot(w1t_ref[...], xm,
                preferred_element_type=jnp.float32) + b1_ref[...]   # (Cw, T)
    h = jnp.maximum(h, 0.0).astype(jnp.bfloat16)
    f = jnp.dot(w2t_ref[...], h,
                preferred_element_type=jnp.float32) + b2_ref[...]   # (C, T)
    fs = (f * mT).astype(jnp.bfloat16)                               # (C, T)

    # projection: contract the vertex (lane) axis of both operands (q.k^T form)
    out_ref[...] += lax.dot_general(
        evT, fs, (((1,), (1,)), ((), ())),
        preferred_element_type=jnp.float32)                          # (K, C)


def pack_two_shapes(shape1, shape2, n_fmap, c_in, tile_n):
    """Builds the (2, Rp, Npad) bf16 packed stream shared by both shapes."""
    n_max = max(shape1['xyz'].shape[0], shape2['xyz'].shape[0])
    t = min(int(tile_n), _round_up(n_max, 128))
    t = _round_up(t, 128)
    n_pad = _round_up(n_max, t)
    rows = n_fmap + c_in + 1
    rows_pad = _round_up(rows, 8)

    def pack_one(s):
        xyz, evecs, mass = s['xyz'], s['evecs'], s['mass']
        n = xyz.shape[0]
        body = jnp.concatenate(
            [evecs[:, :n_fmap].T, xyz.T[:c_in], mass[None, :]], axis=0)
        body = body.astype(jnp.bfloat16)
        # zero-padded vertices have mass == 0 -> exactly zero contribution
        return jnp.pad(body, ((0, rows_pad - rows), (0, n_pad - n)))

    packed = jnp.stack([pack_one(shape1), pack_one(shape2)], axis=0)
    return packed, t


def spectral_project_pair(packed, w1t, b1t, w2t, b2t, n_fmap, tile_n):
    """One pallas_call for both shapes: grid=(2, n_chunks)."""
    S, rows_pad, n_pad = packed.shape
    assert n_pad % tile_n == 0
    n_chunks = n_pad // tile_n
    K = n_fmap
    c_out, c_width = w2t.shape
    cin1 = w1t.shape[1]

    return pl.pallas_call(
        spectral_proj_kernel,
        out_shape=jax.ShapeDtypeStruct((S, K, c_out), jnp.float32),
        grid=(S, n_chunks),
        in_specs=[
            pl.BlockSpec((None, rows_pad, tile_n), lambda s, n: (s, 0, n)),
            pl.BlockSpec((c_width, cin1), lambda s, n: (0, 0)),
            pl.BlockSpec((c_width, 1), lambda s, n: (0, 0)),
            pl.BlockSpec((c_out, c_width), lambda s, n: (0, 0)),
            pl.BlockSpec((c_out, 1), lambda s, n: (0, 0)),
        ],
        out_specs=pl.BlockSpec((None, K, c_out), lambda s, n: (s, 0, 0)),
        compiler_params=pltpu.CompilerParams(
            dimension_semantics=("parallel", "arbitrary"),
            vmem_limit_bytes=32 * 1024 * 1024),
    )(packed, w1t, b1t, w2t, b2t)


# ----------------------------------------------------------------------------
# Kernel 2: RegularizedFMNet solve.
#   AAt = A A^T, BAt = B A^T
#   row i of C:  BAt[i,:] @ (AAt + lambda * diag(D[i,:]))^{-1}
# All K row-systems are eliminated together with ONE batched (unrolled)
# Gauss-Jordan over M (K,K,K) / rhs (K,1,K).
# ----------------------------------------------------------------------------
def fm_solve_kernel(a_ref, b_ref, d_ref, c_ref, m_scr, rhs_scr,
                    *, lam, ridge_eps):
    K = d_ref.shape[0]

    A = a_ref[...]                                            # (K, C)
    fdims = (((1,), (1,)), ((), ()))                          # contract feature axis
    AAt = lax.dot_general(A, A, fdims, preferred_element_type=jnp.float32)
    BAt = lax.dot_general(b_ref[...], A, fdims,
                          preferred_element_type=jnp.float32)

    rk = lax.broadcasted_iota(jnp.int32, (K, K), 0)
    ck = lax.broadcasted_iota(jnp.int32, (K, K), 1)
    eye = (rk == ck).astype(jnp.float32)
    # relative ridge: M_i is SPD, so unpivoted GJ is safe; the ridge only
    # guards near-singular AAt (perturbation O(ridge_eps * cond)).
    ridge = ridge_eps * jnp.sum(AAt * eye) / K

    # stage the K systems with 2D ops + per-page stores (no 3D reshapes)
    for i in range(K):
        d_row = d_ref[i:i + 1, :]                             # (1, K)
        m_scr[i] = AAt + eye * (lam * d_row + ridge)          # (K, K) page
        rhs_scr[i] = BAt[i:i + 1, :]                          # (1, K) page

    M = m_scr[...]                                            # (K, K, K)
    rhs = rhs_scr[...]                                        # (K, 1, K)

    lane = lax.broadcasted_iota(jnp.int32, (1, 1, K), 2)      # hoisted
    for p in range(K):                                        # unrolled pivots
        prow = M[:, p:p + 1, :]                               # (K, 1, K)
        pcol_m = M[:, :, p:p + 1]                             # (K, K, 1)
        pcol_b = rhs[:, :, p:p + 1]                           # (K, 1, 1)
        piv = M[:, p:p + 1, p:p + 1]                          # (K, 1, 1)
        r = pl.reciprocal(piv, approx=True)                   # EUP slot
        inv = r * (2.0 - piv * r)                             # Newton -> ~f32 exact
        prow_s = prow * inv
        is_p = lane == p
        M = jnp.where(is_p, pcol_m * inv, M - pcol_m * prow_s)
        rhs = jnp.where(is_p, pcol_b * inv, rhs - pcol_b * prow_s)

    c_ref[...] = rhs                                          # rhs[i,0,:] = BAt[i] @ M_i^{-1}


def fm_solve(A, B, D, lam, ridge_eps=1e-6):
    K, C = A.shape
    kernel = functools.partial(fm_solve_kernel, lam=float(lam),
                               ridge_eps=float(ridge_eps))
    out = pl.pallas_call(
        kernel,
        out_shape=jax.ShapeDtypeStruct((K, 1, K), jnp.float32),
        grid=(1,),
        in_specs=[
            pl.BlockSpec((K, C), lambda i: (0, 0)),
            pl.BlockSpec((K, C), lambda i: (0, 0)),
            pl.BlockSpec((K, K), lambda i: (0, 0)),
        ],
        out_specs=pl.BlockSpec((K, 1, K), lambda i: (0, 0, 0)),
        scratch_shapes=[pltpu.VMEM((K, K, K), jnp.float32),   # stacked systems
                        pltpu.VMEM((K, 1, K), jnp.float32)],  # stacked RHS
        compiler_params=pltpu.CompilerParams(
            dimension_semantics=("arbitrary",)),
    )(A, B, D)
    return out[:, 0, :]


# ----------------------------------------------------------------------------
# Canonical resolvant mask (tiny elementwise glue, plain JAX)
# ----------------------------------------------------------------------------
def get_mask(evals_x, evals_y, gamma):
    scaling = jnp.maximum(jnp.max(evals_x), jnp.max(evals_y))
    e1 = evals_x / scaling
    e2 = evals_y / scaling
    g1 = e1 ** gamma
    g2 = e2 ** gamma
    g1r = g1[None, :]
    g2c = g2[:, None]
    m_re = g2c / (g2c ** 2 + 1.0) - g1r / (g1r ** 2 + 1.0)
    m_im = 1.0 / (g2c ** 2 + 1.0) - 1.0 / (g1r ** 2 + 1.0)
    return m_re ** 2 + m_im ** 2          # (K, K): rows ~ evals_y, cols ~ evals_x


# ----------------------------------------------------------------------------
# DQFMNet (Pallas version)
# ----------------------------------------------------------------------------
class DQFMNetPallas:
    def __init__(self, cfg, key, *, tile_n=4096):
        f = cfg['fmap']
        self.lambda_ = f['lambda_']
        self.gamma = f['resolvant_gamma']
        self.n_fmap = f['n_fmap']
        self.n_cfmap = f['n_cfmap']
        self.c_in = f['C_in']
        self.tile_n = tile_n
        c_width, n_feat = 128, f['n_feat']

        k1, k2, k3, k4 = jax.random.split(key, 4)
        w1 = (jax.random.normal(k1, (self.c_in, c_width), jnp.float32)
              / jnp.sqrt(float(self.c_in)))
        w2 = (jax.random.normal(k2, (c_width, n_feat), jnp.float32)
              / jnp.sqrt(float(c_width)))
        # transposed, MXU-ready bf16 weights (pre-cast once, per perf review).
        # w1t gets a zero column so the packed mass row does not feed layer 1.
        self.w1t = jnp.concatenate(
            [w1.T, jnp.zeros((c_width, 1), jnp.float32)], axis=1
        ).astype(jnp.bfloat16)                                  # (Cw, C_in+1)
        self.w2t = w2.T.astype(jnp.bfloat16)                    # (n_feat, Cw)
        self.b1t = 0.1 * jax.random.normal(k3, (c_width, 1), jnp.float32)
        self.b2t = 0.1 * jax.random.normal(k4, (n_feat, 1), jnp.float32)

    def __call__(self, batch):
        s1, s2 = batch['shape1'], batch['shape2']
        K = self.n_fmap

        packed, t = pack_two_shapes(s1, s2, K, self.c_in, self.tile_n)
        AB = spectral_project_pair(packed, self.w1t, self.b1t,
                                   self.w2t, self.b2t, K, t)     # (2, K, C)
        A, B = AB[0], AB[1]

        D = get_mask(s1['evals'][:K], s2['evals'][:K], self.gamma)
        C = fm_solve(A, B, D, self.lambda_)
        C_pred = C[None]                       # (1, K, K) like the torch output

        if self.n_cfmap == 0:
            return C_pred, None
        # TODO(synk): complex128 q-fmap path (RegularizedCFMNet) not supported on TPU.
        raise NotImplementedError("complex q-fmap path not implemented")


if __name__ == "__main__":
    key = jax.random.PRNGKey(0)
    N1, N2 = 384, 320
    K_TOTAL = 32

    cfg = {'fmap': {'C_in': 3, 'n_feat': 32, 'n_fmap': 16, 'n_cfmap': 0,
                    'lambda_': 0.001, 'resolvant_gamma': 0.5, 'robust': False}}

    keys = jax.random.split(key, 12)
    # tile_n=128 -> 3 streamed N-chunks, exercising the resident accumulator,
    # the per-shape parallel axis, and padding for shapes of different size.
    net = DQFMNetPallas(cfg, keys[0], tile_n=128)

    def make_shape(kv, kev, km, ke, n):
        verts = jax.random.normal(kv, (n, 3), jnp.float32)
        evecs = jax.random.normal(kev, (n, K_TOTAL), jnp.float32) * 0.1
        mass = jax.random.uniform(km, (n,), jnp.float32,
                                  minval=0.5, maxval=1.5) / n
        evals = jnp.cumsum(jax.random.uniform(ke, (K_TOTAL,), jnp.float32,
                                              minval=0.05, maxval=0.5))
        faces = jnp.zeros((1, 3), jnp.int32)
        return {'xyz': verts, 'faces': faces, 'mass': mass, 'L': None,
                'evals': evals, 'evecs': evecs, 'gradX': None, 'gradY': None}

    batch = {
        'shape1': make_shape(keys[1], keys[2], keys[3], keys[4], N1),
        'shape2': make_shape(keys[5], keys[6], keys[7], keys[8], N2),
    }

    C_pred, Q_pred = net(batch)
    jax.block_until_ready(C_pred)

    # --- plain-JAX reference of the same math (bf16 packing mirrored) --------
    K = cfg['fmap']['n_fmap']
    lam = cfg['fmap']['lambda_']
    gamma = cfg['fmap']['resolvant_gamma']
    bf = jnp.bfloat16
    w1t32 = net.w1t.astype(jnp.float32)
    w2t32 = net.w2t.astype(jnp.float32)

    def proj_ref(s):
        evT = s['evecs'][:, :K].T.astype(bf).astype(jnp.float32)      # (K, N)
        x = s['xyz'].T.astype(bf).astype(jnp.float32)                 # (3, N)
        m = s['mass'].astype(bf).astype(jnp.float32)[None, :]         # (1, N)
        xm = jnp.concatenate([x, m], axis=0)                          # (4, N)
        h = jnp.maximum(w1t32 @ xm + net.b1t, 0.0).astype(bf).astype(jnp.float32)
        f = w2t32 @ h + net.b2t                                       # (C, N)
        fs = (f * m).astype(bf).astype(jnp.float32)
        return evT @ fs.T                                             # (K, C)

    A_ref = proj_ref(batch['shape1'])
    B_ref = proj_ref(batch['shape2'])

    # check the fused streaming kernel output against the reference projection
    packed, t = pack_two_shapes(batch['shape1'], batch['shape2'], K,
                                cfg['fmap']['C_in'], net.tile_n)
    AB = spectral_project_pair(packed, net.w1t, net.b1t, net.w2t, net.b2t, K, t)
    errA = float(jnp.max(jnp.abs(AB[0] - A_ref)))
    sclA = float(jnp.max(jnp.abs(A_ref))) + 1e-9
    assert errA <= 1e-2 * sclA + 1e-4, f"A mismatch vs reference: {errA}"
    errB = float(jnp.max(jnp.abs(AB[1] - B_ref)))
    sclB = float(jnp.max(jnp.abs(B_ref))) + 1e-9
    assert errB <= 1e-2 * sclB + 1e-4, f"B mismatch vs reference: {errB}"

    # end-to-end functional-map check
    D = get_mask(batch['shape1']['evals'][:K], batch['shape2']['evals'][:K],
                 gamma)
    AAt = A_ref @ A_ref.T
    BAt = B_ref @ A_ref.T
    rows = [jnp.linalg.solve(AAt + lam * jnp.diag(D[i]), BAt[i])
            for i in range(K)]
    C_ref = jnp.stack(rows, axis=0)

    err = float(jnp.max(jnp.abs(C_pred[0] - C_ref)))
    scale = float(jnp.max(jnp.abs(C_ref))) + 1e-6
    assert err <= 2e-2 * scale + 5e-3, f"C mismatch vs reference: {err}"
    assert C_pred.shape == (1, K, K)
    assert Q_pred is None

    print("KERNEL_OK")
</pallas_src>

<mosaic_0001>
module attributes {stable_mosaic.version = 11 : i64} {
  func.func @spectral_proj_kernel(%arg0: i32, %arg1: i32, %arg2: memref<1x24x128xbf16, #tpu.memory_space<vmem>>, %arg3: memref<128x4xbf16, #tpu.memory_space<vmem>>, %arg4: memref<128x1xf32, #tpu.memory_space<vmem>>, %arg5: memref<32x128xbf16, #tpu.memory_space<vmem>>, %arg6: memref<32x1xf32, #tpu.memory_space<vmem>>, %arg7: memref<1x16x32xf32, #tpu.memory_space<vmem>>) attributes {dimension_semantics = [#tpu.dimension_semantics<parallel>, #tpu.dimension_semantics<arbitrary>], iteration_bounds = array<i64: 2, 3>, scalar_prefetch = 0 : i64, scratch_operands = 0 : i64, tpu.core_type = #tpu.core_type<tc>, window_params = [{transform_indices = @transform_0, window_bounds = array<i64: 1, 24, 128>}, {pipeline_mode = #tpu.pipeline_mode<synchronous>, transform_indices = @transform_1, window_bounds = array<i64: 128, 4>}, {pipeline_mode = #tpu.pipeline_mode<synchronous>, transform_indices = @transform_2, window_bounds = array<i64: 128, 1>}, {pipeline_mode = #tpu.pipeline_mode<synchronous>, transform_indices = @transform_3, window_bounds = array<i64: 32, 128>}, {pipeline_mode = #tpu.pipeline_mode<synchronous>, transform_indices = @transform_4, window_bounds = array<i64: 32, 1>}, {transform_indices = @transform_5, window_bounds = array<i64: 1, 16, 32>}]} {
    %c0_i32 = arith.constant 0 : i32
    %0 = arith.cmpi eq, %arg1, %c0_i32 : i32
    %1 = arith.extui %0 : i1 to i32
    %c0_i32_0 = arith.constant 0 : i32
    %2 = arith.cmpi ne, %1, %c0_i32_0 : i32
    scf.if %2 {
      %cst_24 = arith.constant 0.000000e+00 : f32
      %33 = vector.broadcast %cst_24 : f32 to vector<16x32xf32>
      %c0_25 = arith.constant 0 : index
      %c0_26 = arith.constant 0 : index
      %c0_27 = arith.constant 0 : index
      %34 = vector.load %arg7[%c0_25, %c0_26, %c0_27] : memref<1x16x32xf32, #tpu.memory_space<vmem>>, vector<1x16x32xf32>
      %35 = vector.shape_cast %34 : vector<1x16x32xf32> to vector<16x32xf32>
      %36 = vector.shape_cast %33 : vector<16x32xf32> to vector<1x16x32xf32>
      tpu.vector_store %arg7[%c0_25, %c0_26, %c0_27], %36 {strides = array<i32>} : memref<1x16x32xf32, #tpu.memory_space<vmem>>, vector<1x16x32xf32>,
    } else {
    }
    %c0 = arith.constant 0 : index
    %c0_1 = arith.constant 0 : index
    %c0_2 = arith.constant 0 : index
    %3 = vector.load %arg2[%c0, %c0_1, %c0_2] : memref<1x24x128xbf16, #tpu.memory_space<vmem>>, vector<1x16x128xbf16>
    %4 = vector.shape_cast %3 : vector<1x16x128xbf16> to vector<16x128xbf16>
    %c0_3 = arith.constant 0 : index
    %c16 = arith.constant 16 : index
    %c0_4 = arith.constant 0 : index
    %5 = vector.load %arg2[%c0_3, %c16, %c0_4] : memref<1x24x128xbf16, #tpu.memory_space<vmem>>, vector<1x4x128xbf16>
    %6 = vector.shape_cast %5 : vector<1x4x128xbf16> to vector<4x128xbf16>
    %c0_5 = arith.constant 0 : index
    %c19 = arith.constant 19 : index
    %c0_6 = arith.constant 0 : index
    %7 = vector.load %arg2[%c0_5, %c19, %c0_6] : memref<1x24x128xbf16, #tpu.memory_space<vmem>>, vector<1x1x128xbf16>
    %8 = vector.shape_cast %7 : vector<1x1x128xbf16> to vector<1x128xbf16>
    %9 = arith.extf %8 : vector<1x128xbf16> to vector<1x128xf32>
    %c0_7 = arith.constant 0 : index
    %c0_8 = arith.constant 0 : index
    %10 = vector.load %arg3[%c0_7, %c0_8] : memref<128x4xbf16, #tpu.memory_space<vmem>>, vector<128x4xbf16>
    %cst = arith.constant dense<0.000000e+00> : vector<128x128xf32>
    %11 = tpu.matmul %10, %6, %cst {dimension_numbers = #tpu.dot_dimension_numbers<[1], [0], [0], [1], [0, 0, 1, 1], [], []>} : vector<128x4xbf16>, vector<4x128xbf16>, vector<128x128xf32> -> vector<128x128xf32>
    %c0_9 = arith.constant 0 : index
    %c0_10 = arith.constant 0 : index
    %12 = vector.load %arg4[%c0_9, %c0_10] : memref<128x1xf32, #tpu.memory_space<vmem>>, vector<128x1xf32>
    %13 = vector.broadcast %12 : vector<128x1xf32> to vector<128x128xf32>
    %14 = arith.addf %11, %13 : vector<128x128xf32>
    %cst_11 = arith.constant 0.000000e+00 : f32
    %15 = vector.broadcast %cst_11 : f32 to vector<128x128xf32>
    %16 = arith.maximumf %14, %15 : vector<128x128xf32>
    %17 = arith.truncf %16 : vector<128x128xf32> to vector<128x128xbf16>
    %c0_12 = arith.constant 0 : index
    %c0_13 = arith.constant 0 : index
    %18 = vector.load %arg5[%c0_12, %c0_13] : memref<32x128xbf16, #tpu.memory_space<vmem>>, vector<32x128xbf16>
    %cst_14 = arith.constant dense<0.000000e+00> : vector<32x128xf32>
    %19 = tpu.matmul %18, %17, %cst_14 {dimension_numbers = #tpu.dot_dimension_numbers<[1], [0], [0], [1], [0, 0, 1, 1], [], []>} : vector<32x128xbf16>, vector<128x128xbf16>, vector<32x128xf32> -> vector<32x128xf32>
    %c0_15 = arith.constant 0 : index
    %c0_16 = arith.constant 0 : index
    %20 = vector.load %arg6[%c0_15, %c0_16] : memref<32x1xf32, #tpu.memory_space<vmem>>, vector<32x1xf32>
    %21 = vector.broadcast %20 : vector<32x1xf32> to vector<32x128xf32>
    %22 = arith.addf %19, %21 : vector<32x128xf32>
    %23 = vector.broadcast %9 : vector<1x128xf32> to vector<32x128xf32>
    %24 = arith.mulf %22, %23 : vector<32x128xf32>
    %25 = arith.truncf %24 : vector<32x128xf32> to vector<32x128xbf16>
    %c0_17 = arith.constant 0 : index
    %c0_18 = arith.constant 0 : index
    %c0_19 = arith.constant 0 : index
    %26 = vector.load %arg7[%c0_17, %c0_18, %c0_19] : memref<1x16x32xf32, #tpu.memory_space<vmem>>, vector<1x16x32xf32>
    %27 = vector.shape_cast %26 : vector<1x16x32xf32> to vector<16x32xf32>
    %cst_20 = arith.constant dense<0.000000e+00> : vector<16x32xf32>
    %28 = tpu.matmul %4, %25, %cst_20 {dimension_numbers = #tpu.dot_dimension_numbers<[1], [1], [0], [0], [0, 0, 1, 0], [], []>} : vector<16x128xbf16>, vector<32x128xbf16>, vector<16x32xf32> -> vector<16x32xf32>
    %29 = arith.addf %27, %28 : vector<16x32xf32>
    %c0_21 = arith.constant 0 : index
    %c0_22 = arith.constant 0 : index
    %c0_23 = arith.constant 0 : index
    %30 = vector.load %arg7[%c0_21, %c0_22, %c0_23] : memref<1x16x32xf32, #tpu.memory_space<vmem>>, vector<1x16x32xf32>
    %31 = vector.shape_cast %30 : vector<1x16x32xf32> to vector<16x32xf32>
    %32 = vector.shape_cast %29 : vector<16x32xf32> to vector<1x16x32xf32>
    tpu.vector_store %arg7[%c0_21, %c0_22, %c0_23], %32 {strides = array<i32>} : memref<1x16x32xf32, #tpu.memory_space<vmem>>, vector<1x16x32xf32>,
    return
  }
  func.func @transform_0(%arg0: i32, %arg1: i32) -> (i32, i32, i32) {
    %c0_i32 = arith.constant 0 : i32
    %c0_i32_0 = arith.constant 0 : i32
    return %arg0, %c0_i32, %arg1 : i32, i32, i32
  }
  func.func @transform_1(%arg0: i32, %arg1: i32) -> (i32, i32) {
    %c0_i32 = arith.constant 0 : i32
    %c0_i32_0 = arith.constant 0 : i32
    %c0_i32_1 = arith.constant 0 : i32
    return %c0_i32, %c0_i32_0 : i32, i32
  }
  func.func @transform_2(%arg0: i32, %arg1: i32) -> (i32, i32) {
    %c0_i32 = arith.constant 0 : i32
    %c0_i32_0 = arith.constant 0 : i32
    %c0_i32_1 = arith.constant 0 : i32
    return %c0_i32, %c0_i32_0 : i32, i32
  }
  func.func @transform_3(%arg0: i32, %arg1: i32) -> (i32, i32) {
    %c0_i32 = arith.constant 0 : i32
    %c0_i32_0 = arith.constant 0 : i32
    %c0_i32_1 = arith.constant 0 : i32
    return %c0_i32, %c0_i32_0 : i32, i32
  }
  func.func @transform_4(%arg0: i32, %arg1: i32) -> (i32, i32) {
    %c0_i32 = arith.constant 0 : i32
    %c0_i32_0 = arith.constant 0 : i32
    %c0_i32_1 = arith.constant 0 : i32
    return %c0_i32, %c0_i32_0 : i32, i32
  }
  func.func @transform_5(%arg0: i32, %arg1: i32) -> (i32, i32, i32) {
    %c0_i32 = arith.constant 0 : i32
    %c0_i32_0 = arith.constant 0 : i32
    %c0_i32_1 = arith.constant 0 : i32
    return %arg0, %c0_i32, %c0_i32_0 : i32, i32, i32
  }
}

</mosaic_0001>

<llo_original>
// kernel: tpu_custom_call.1
$region0: #{tpu_custom_call.1}
  #allocation0 [shape = 'u32[]', space=smem, size = 0x4, offset = 0x4, fixed_abs, tag = 'smem constant byte address 0x4 - core index']
  #allocation1 [shape = 'u32[144,128]{1,0:T(1,128)}', space=vmem, size = 0x12000, scoped, tag = 'internal scratch']
  %s0 = inlined_call_operand.vmem [shape: bf16[2,24,384], index: 0, kind: input, shape index: {}]
  %s1 = inlined_call_operand.vmem [shape: bf16[128,4], index: 1, kind: input, shape index: {}]
  %s2 = inlined_call_operand.vmem [shape: f32[128,1], index: 2, kind: input, shape index: {}]
  %s3 = inlined_call_operand.vmem [shape: bf16[32,128], index: 3, kind: input, shape index: {}]
  %s4 = inlined_call_operand.vmem [shape: f32[32,1], index: 4, kind: input, shape index: {}]
  %s5 = inlined_call_operand.hbm [shape: f32[2,16,32], index: 5, kind: output, shape index: {}]
  %s6 = sld [smem:[#allocation0]]
  $region98: #{tpu_custom_call.1} parent=0
    _
  %s8 = ssub.s32 1, %s6
  %s9 = scalar_select 0, %s8, %s6
  $region1: #{tpu_custom_call.1} parent=0
    #allocation2 [shape = 'u8[12288]{0}', space=vmem, size = 0x3000, scoped, tag = 'input window, operand 0']
    #allocation3 [shape = 'u8[16384]{0}', space=vmem, size = 0x4000, scoped, tag = 'output window, operand 0']
    #allocation4 [shape = 's32[2]{0}', space=sflag, size = 0x8, scoped, tag = 'scoped memory for tpu_custom_call.1']
    %10 = vsyncpa [#allocation4], 0
    %s11 = scalar_lea.sflag [#allocation4], 1
    %12 = vsyncpa %s11, 0
    loop: start=0, step=1, limit=8
    $region2: #{tpu_custom_call.1} parent=1 // loop_pre_header
      _
    $region3: #{tpu_custom_call.1} parent=1 // loop_header
      %s14 = sphi 0, %s18
      %p15 = scmp.ge.s32.totalorder %s14, 8
      %s21 = sphi 0, %s33
      %s22 = sphi 0, %s29
      %s23 = sphi 0, %s21
      %s24 = sphi 0, %s22
      %s25 = sphi 0, %s23
      %s26 = sphi 0, %s24
      %s38 = sphi 0, %s40
      %s41 = sphi 0, %s38
      %s42 = sphi 0, %s41
      %s58 = sphi 0, %s42
      %s62 = sphi 0, %s62
      %s64 = sphi 0, %s62
      %s65 = sphi 0, %s64
      %s79 = sphi 0, %s65
      %s83 = sphi 0, %s83
      %s85 = sphi 0, %s83
      %s86 = sphi 0, %s85
      %s100 = sphi 0, %s86
      %s104 = sphi 0, %s104
      %s106 = sphi 0, %s104
      %s107 = sphi 0, %s106
      %s121 = sphi 0, %s107
      %s125 = sphi 0, %s125
      %s127 = sphi 0, %s125
      %s128 = sphi 0, %s127
      %s142 = sphi 0, %s128
      %s148 = sphi 0, %s150
      %s151 = sphi 0, %s148
      %s152 = sphi 0, %s151
      %s168 = sphi 0, %s152
    $region4: #{tpu_custom_call.1} parent=1 // loop_header_branch
      %17 = sbr.rel (%p15) target = $region8
    $region5: #{tpu_custom_call.1} parent=1 // loop_body
      %s19 = ssub.s32 %s14, 1
      %s20 = ssub.s32 %s14, 2
      %s27 = sadd.s32 1, %s22
      %p28 = scmp.ge.s32.totalorder %s27, 3
      %s29 = scalar_select %p28, 0, %s27
      %s30 = sadd.s32 1, %s21
      %s31 = scalar_select %p28, %s30, %s21
      %p32 = scmp.ge.s32.totalorder %s31, 2
      %s33 = scalar_select %p32, 0, %s31
      %s34 = ssub.s32 %s21, %s33
      %s35 = ssub.s32 %s22, %s29
      %s36 = sor.u32 %s34, %s35
      %p37 = scmp.eq.s32.totalorder %s36, 0
      %s39 = sadd.s32 %s38, 1
      %s40 = scalar_select %p37, %s38, %s39
      %p43 = pneg %p37
      %p44 = scmp.eq.s32.totalorder %s14, 5
      %p45 = por %p43, %p44
      %p46 = scmp.ne.s32.totalorder %s38, %s41
      %p47 = scmp.eq.s32.totalorder %s14, 0
      %p48 = por %p46, %p47
      %p49 = scmp.ne.s32.totalorder %s38, %s41
      %p50 = scmp.eq.s32.totalorder %s19, 5
      %p51 = por %p49, %p50
      %p52 = scmp.ne.s32.totalorder %s41, %s42
      %p53 = scmp.eq.s32.totalorder %s19, 0
      %p54 = por %p52, %p53
      %p55 = scmp.ne.s32.totalorder %s41, %s42
      %p56 = scmp.eq.s32.totalorder %s20, 5
      %p57 = por %p55, %p56
      %p59 = scmp.ne.s32.totalorder %s42, %s58
      %p60 = scmp.eq.s32.totalorder %s20, 0
      %p61 = por %p59, %p60
      %s63 = sadd.s32 %s62, 1
      %p66 = scmp.eq.s32.totalorder %s14, 5
      %p67 = scmp.ne.s32.totalorder %s62, %s64
      %p68 = scmp.eq.s32.totalorder %s14, 0
      %p69 = por %p67, %p68
      %p70 = scmp.ne.s32.totalorder %s62, %s64
      %p71 = scmp.eq.s32.totalorder %s19, 5
      %p72 = por %p70, %p71
      %p73 = scmp.ne.s32.totalorder %s64, %s65
      %p74 = scmp.eq.s32.totalorder %s19, 0
      %p75 = por %p73, %p74
      %p76 = scmp.ne.s32.totalorder %s64, %s65
      %p77 = scmp.eq.s32.totalorder %s20, 5
      %p78 = por %p76, %p77
      %p80 = scmp.ne.s32.totalorder %s65, %s79
      %p81 = scmp.eq.s32.totalorder %s20, 0
      %p82 = por %p80, %p81
      %s84 = sadd.s32 %s83, 1
      %p87 = scmp.eq.s32.totalorder %s14, 5
      %p88 = scmp.ne.s32.totalorder %s83, %s85
      %p89 = scmp.eq.s32.totalorder %s14, 0
      %p90 = por %p88, %p89
      %p91 = scmp.ne.s32.totalorder %s83, %s85
      %p92 = scmp.eq.s32.totalorder %s19, 5
      %p93 = por %p91, %p92
      %p94 = scmp.ne.s32.totalorder %s85, %s86
      %p95 = scmp.eq.s32.totalorder %s19, 0
      %p96 = por %p94, %p95
      %p97 = scmp.ne.s32.totalorder %s85, %s86
      %p98 = scmp.eq.s32.totalorder %s20, 5
      %p99 = por %p97, %p98
      %p101 = scmp.ne.s32.totalorder %s86, %s100
      %p102 = scmp.eq.s32.totalorder %s20, 0
      %p103 = por %p101, %p102
      %s105 = sadd.s32 %s104, 1
      %p108 = scmp.eq.s32.totalorder %s14, 5
      %p109 = scmp.ne.s32.totalorder %s104, %s106
      %p110 = scmp.eq.s32.totalorder %s14, 0
      %p111 = por %p109, %p110
      %p112 = scmp.ne.s32.totalorder %s104, %s106
      %p113 = scmp.eq.s32.totalorder %s19, 5
      %p114 = por %p112, %p113
      %p115 = scmp.ne.s32.totalorder %s106, %s107
      %p116 = scmp.eq.s32.totalorder %s19, 0
      %p117 = por %p115, %p116
      %p118 = scmp.ne.s32.totalorder %s106, %s107
      %p119 = scmp.eq.s32.totalorder %s20, 5
      %p120 = por %p118, %p119
      %p122 = scmp.ne.s32.totalorder %s107, %s121
      %p123 = scmp.eq.s32.totalorder %s20, 0
      %p124 = por %p122, %p123
      %s126 = sadd.s32 %s125, 1
      %p129 = scmp.eq.s32.totalorder %s14, 5
      %p130 = scmp.ne.s32.totalorder %s125, %s127
      %p131 = scmp.eq.s32.totalorder %s14, 0
      %p132 = por %p130, %p131
      %p133 = scmp.ne.s32.totalorder %s125, %s127
      %p134 = scmp.eq.s32.totalorder %s19, 5
      %p135 = por %p133, %p134
      %p136 = scmp.ne.s32.totalorder %s127, %s128
      %p137 = scmp.eq.s32.totalorder %s19, 0
      %p138 = por %p136, %p137
      %p139 = scmp.ne.s32.totalorder %s127, %s128
      %p140 = scmp.eq.s32.totalorder %s20, 5
      %p141 = por %p139, %p140
      %p143 = scmp.ne.s32.totalorder %s128, %s142
      %p144 = scmp.eq.s32.totalorder %s20, 0
      %p145 = por %p143, %p144
      %s146 = ssub.s32 %s21, %s33
      %p147 = scmp.eq.s32.totalorder %s146, 0
      %s149 = sadd.s32 %s148, 1
      %s150 = scalar_select %p147, %s148, %s149
      %p153 = pneg %p147
      %p154 = scmp.eq.s32.totalorder %s14, 5
      %p155 = por %p153, %p154
      %p156 = scmp.ne.s32.totalorder %s148, %s151
      %p157 = scmp.eq.s32.totalorder %s14, 0
      %p158 = por %p156, %p157
      %p159 = scmp.ne.s32.totalorder %s148, %s151
      %p160 = scmp.eq.s32.totalorder %s19, 5
      %p161 = por %p159, %p160
      %p162 = scmp.ne.s32.totalorder %s151, %s152
      %p163 = scmp.eq.s32.totalorder %s19, 0
      %p164 = por %p162, %p163
      %p165 = scmp.ne.s32.totalorder %s151, %s152
      %p166 = scmp.eq.s32.totalorder %s20, 5
      %p167 = por %p165, %p166
      %p169 = scmp.ne.s32.totalorder %s152, %s168
      %p170 = scmp.eq.s32.totalorder %s20, 0
      %p171 = por %p169, %p170
      %p172 = scmp.le.s32.totalorder 1, %s14
      %p173 = scmp.lt.s32.totalorder %s14, 7
      %p174 = pnand %p172, %p173
      %p175 = pneg %p174
      // Predicated region
      $region9: #{tpu_custom_call.1} parent=5 // pred_check
        _
      $region10: #{tpu_custom_call.1} parent=5 // pred_check_branch
        %177 = sbr.rel (%p174) target = $region12
      $region11: #{tpu_custom_call.1} parent=5 // pred_region
        %s178 = ssub.s32 %s14, 1
        // Predicated region
        $region13: #{tpu_custom_call.1} parent=11 // pred_check
          %p179 = pneg %p75
        $region14: #{tpu_custom_call.1} parent=11 // pred_check_branch
          %181 = sbr.rel (%p179) target = $region16
        $region15: #{tpu_custom_call.1} parent=11 // pred_region
          _
        $region16: #{tpu_custom_call.1} parent=11 // pred_fallthru
          _
        // Predicated region
        $region17: #{tpu_custom_call.1} parent=11 // pred_check
          %p182 = pneg %p96
        $region18: #{tpu_custom_call.1} parent=11 // pred_check_branch
          %184 = sbr.rel (%p182) target = $region20
        $region19: #{tpu_custom_call.1} parent=11 // pred_region
          _
        $region20: #{tpu_custom_call.1} parent=11 // pred_fallthru
          _
        // Predicated region
        $region21: #{tpu_custom_call.1} parent=11 // pred_check
          %p185 = pneg %p117
        $region22: #{tpu_custom_call.1} parent=11 // pred_check_branch
          %187 = sbr.rel (%p185) target = $region24
        $region23: #{tpu_custom_call.1} parent=11 // pred_region
          _
        $region24: #{tpu_custom_call.1} parent=11 // pred_fallthru
          _
        // Predicated region
        $region25: #{tpu_custom_call.1} parent=11 // pred_check
          %p188 = pneg %p138
        $region26: #{tpu_custom_call.1} parent=11 // pred_check_branch
          %190 = sbr.rel (%p188) target = $region28
        $region27: #{tpu_custom_call.1} parent=11 // pred_region
          _
        $region28: #{tpu_custom_call.1} parent=11 // pred_fallthru
          _
      $region12: #{tpu_custom_call.1} parent=5 // pred_fallthru
        _
      %p191 = scmp.lt.s32.totalorder %s14, 6
      // Predicated region
      $region29: #{tpu_custom_call.1} parent=5 // pred_check
        %p192 = pneg %p191
      $region30: #{tpu_custom_call.1} parent=5 // pred_check_branch
        %194 = sbr.rel (%p192) target = $region32
      $region31: #{tpu_custom_call.1} parent=5 // pred_region
        // Predicated region
        $region33: #{tpu_custom_call.1} parent=31 // pred_check
          %p195 = pneg %p48
        $region34: #{tpu_custom_call.1} parent=31 // pred_check_branch
          %197 = sbr.rel (%p195) target = $region36
        $region35: #{tpu_custom_call.1} parent=31 // pred_region
          %s198 = sand.u32 %s38, 1
          %s199 = sand.u32 %s38, 1
          %s200 = smul.addr %s199, 12
          %s201 = scalar_lea.vmem [#allocation2], %s200
          %s202 = smul.addr %s21, 9
          %s203 = sadd.s32 %s22, %s202
          %s204 = smul.addr %s203, 4
          %s205 = scalar_lea.vmem %s0, %s204
          // Predicated region
          $region37: #{tpu_custom_call.1} parent=35 // pred_check
            _
          $region38: #{tpu_custom_call.1} parent=35 // pred_check_branch
            %207 = sbr.rel (0) target = $region40
          $region39: #{tpu_custom_call.1} parent=35 // pred_region
            // Predicated region
            $region41: #{tpu_custom_call.1} parent=39 // pred_check
              _
            $region42: #{tpu_custom_call.1} parent=39 // pred_check_branch
              %209 = sbr.rel target = $region44
            $region43: #{tpu_custom_call.1} parent=39 // pred_region
              // Predicated region
              $region56: #{tpu_custom_call.1} parent=43 // pred_check
                _
              $region57: #{tpu_custom_call.1} parent=43 // pred_check_branch
                %228 = sbr.rel (0) target = $region59
              $region58: #{tpu_custom_call.1} parent=43 // pred_region
                loop: start=0, step=1, limit=1
                $region60: #{tpu_custom_call.1} parent=58 // loop_pre_header
                  _
                $region61: #{tpu_custom_call.1} parent=58 // loop_header
                  %s230 = sphi 0, %s234
                  %p231 = scmp.ge.s32.totalorder %s230, 1
                  %s235 = sphi %s205, %s205
                  %s236 = sphi %s201, %s201
                $region62: #{tpu_custom_call.1} parent=58 // loop_header_branch
                  %233 = sbr.rel (%p231) target = $region66
                $region63: #{tpu_custom_call.1} parent=58 // loop_body
                  _
                $region64: #{tpu_custom_call.1} parent=58 // loop_footer
                  %s234 = sadd.s32 1, %s230
                $region65: #{tpu_custom_call.1} parent=58 // loop_footer_branch
                  %229 = sbr.rel target = $region61
                $region66: #{tpu_custom_call.1} parent=58 // loop_exit
                  _
                loop: start=0, step=1, limit=1
                $region67: #{tpu_custom_call.1} parent=58 // loop_pre_header
                  _
                $region68: #{tpu_custom_call.1} parent=58 // loop_header
                  %s239 = sphi 0, %s243
                  %p240 = scmp.ge.s32.totalorder %s239, 1
                  %s244 = sphi %s205, %s205
                  %s245 = sphi %s201, %s201
                $region69: #{tpu_custom_call.1} parent=58 // loop_header_branch
                  %242 = sbr.rel (%p240) target = $region73
                $region70: #{tpu_custom_call.1} parent=58 // loop_body
                  %v246 = vld [vmem:[%s244] sm:$0xf]
                  %247 = vst [vmem:[%s245] sm:$0xf] %v246
                  %v248 = vld [vmem:[%s244 + $0xc] sm:$0xf]
                  %249 = vst [vmem:[%s245 + $0x4] sm:$0xf] %v248
                  %v250 = vld [vmem:[%s244 + $0x18] sm:$0xf]
                  %251 = vst [vmem:[%s245 + $0x8] sm:$0xf] %v250
                $region71: #{tpu_custom_call.1} parent=58 // loop_footer
                  %s243 = sadd.s32 1, %s239
                $region72: #{tpu_custom_call.1} parent=58 // loop_footer_branch
                  %238 = sbr.rel target = $region68
                $region73: #{tpu_custom_call.1} parent=58 // loop_exit
                  _
              $region59: #{tpu_custom_call.1} parent=43 // pred_fallthru
                _
            $region44: #{tpu_custom_call.1} parent=39 // pred_fallthru
              _
            // Predicated region
            $region45: #{tpu_custom_call.1} parent=39 // pred_check
              _
            $region46: #{tpu_custom_call.1} parent=39 // pred_check_branch
              %211 = sbr.rel (0) target = $region48
            $region47: #{tpu_custom_call.1} parent=39 // pred_region
              loop: start=0, step=1, limit=1
              $region49: #{tpu_custom_call.1} parent=47 // loop_pre_header
                _
              $region50: #{tpu_custom_call.1} parent=47 // loop_header
                %s214 = sphi 0, %s218
                %p215 = scmp.ge.s32.totalorder %s214, 1
                %s219 = sphi %s205, %s205
                %s220 = sphi %s201, %s201
              $region51: #{tpu_custom_call.1} parent=47 // loop_header_branch
                %217 = sbr.rel (%p215) target = $region55
              $region52: #{tpu_custom_call.1} parent=47 // loop_body
                %v221 = vld [vmem:[%s219] sm:$0xf]
                %222 = vst [vmem:[%s220] sm:$0xf] %v221
                %v223 = vld [vmem:[%s219 + $0xc] sm:$0xf]
                %224 = vst [vmem:[%s220 + $0x4] sm:$0xf] %v223
                %v225 = vld [vmem:[%s219 + $0x18] sm:$0xf]
                %226 = vst [vmem:[%s220 + $0x8] sm:$0xf] %v225
              $region53: #{tpu_custom_call.1} parent=47 // loop_footer
                %s218 = sadd.s32 1, %s214
              $region54: #{tpu_custom_call.1} parent=47 // loop_footer_branch
                %213 = sbr.rel target = $region50
              $region55: #{tpu_custom_call.1} parent=47 // loop_exit
                _
            $region48: #{tpu_custom_call.1} parent=39 // pred_fallthru
              _
          $region40: #{tpu_custom_call.1} parent=35 // pred_fallthru
            _
          %252 = vnop
        $region36: #{tpu_custom_call.1} parent=31 // pred_fallthru
          _
      $region32: #{tpu_custom_call.1} parent=5 // pred_fallthru
        _
      %p253 = scmp.le.s32.totalorder 1, %s14
      %p254 = scmp.lt.s32.totalorder %s14, 7
      %p255 = pnand %p253, %p254
      %p256 = pneg %p255
      // Predicated region
      $region74: #{tpu_custom_call.1} parent=5 // pred_check
        _
      $region75: #{tpu_custom_call.1} parent=5 // pred_check_branch
        %258 = sbr.rel (%p255) target = $region77
      $region76: #{tpu_custom_call.1} parent=5 // pred_region
        %s259 = ssub.s32 %s14, 1
        %s260 = sand.u32 %s41, 1
        %s261 = sand.u32 %s41, 1
        %s262 = smul.addr %s261, 12
        %s263 = scalar_lea.vmem [#allocation2], %s262
        // Predicated region
        $region78: #{tpu_custom_call.1} parent=76 // pred_check
          %p264 = pneg %p54
        $region79: #{tpu_custom_call.1} parent=76 // pred_check_branch
          %266 = sbr.rel (%p264) target = $region81
        $region80: #{tpu_custom_call.1} parent=76 // pred_region
          _
        $region81: #{tpu_custom_call.1} parent=76 // pred_fallthru
          _
        %s267 = sand.u32 %s41, 1
        %s268 = sand.u32 %s41, 1
        %s269 = smul.addr %s268, 12
        %s270 = scalar_lea.vmem [#allocation2], %s269
        %p271 = pneg %p54
        %p272 = pneg %p51
        %p273 = pneg %p75
        %p274 = pneg %p72
        %p275 = pneg %p96
        %p276 = pneg %p93
        %p277 = pneg %p117
        %p278 = pneg %p114
        %p279 = pneg %p138
        %p280 = pneg %p135
        %p281 = pneg %p164
        %p282 = pneg %p161
        %s283 = sand.u32 %s151, 1
        %s284 = scalar_lea.sflag [#allocation4], %s283
        %s285 = sand.u32 %s151, 1
        %s286 = smul.addr %s285, 16
        %s287 = scalar_lea.vmem [#allocation3], %s286
        %p289 = scmp.eq.s32.totalorder %s24, 0
        // Predicated region
        $region82: #{tpu_custom_call.1} parent=76 // pred_check
          %p290 = pneg %p289
        $region83: #{tpu_custom_call.1} parent=76 // pred_check_branch
          %292 = sbr.rel (%p290) target = $region85
        $region84: #{tpu_custom_call.1} parent=76 // pred_region
          %vm293 = vcmask 261120
          %294 = vst.msk [vmem:[%s287] sm:$0xff] %vm293, 0.0
          %295 = vst.msk [vmem:[%s287 + $0x8] sm:$0xff] %vm293, 0.0
        $region85: #{tpu_custom_call.1} parent=76 // pred_fallthru
          _
        %v296 = vld [vmem:[%s263] sm:$0xf]
        %v297 = vld [vmem:[%s263 + $0x4] sm:$0xf]
        %v298 = vld [vmem:[%s263 + $0x8] sm:$0x3]
        %v299 = vld [vmem:[%s263 + $0x8] sm:$0x2]
        %v300 = vunpack.c.l.bf16 %v299
        %v301 = vld [vmem:[%s1] sm:$0xf]
        %v302 = vld [vmem:[%s1 + $0x4] sm:$0xf]
        %v303 = vld [vmem:[%s1 + $0x8] sm:$0xf]
        %v304 = vld [vmem:[%s1 + $0xc] sm:$0xf]
        %v305 = vld [vmem:[%s1 + $0x10] sm:$0xf]
        %v306 = vld [vmem:[%s1 + $0x14] sm:$0xf]
        %v307 = vld [vmem:[%s1 + $0x18] sm:$0xf]
        %v308 = vld [vmem:[%s1 + $0x1c] sm:$0xf]
        %v309 = vld [vmem:[%s1 + $0x20] sm:$0xf]
        %v310 = vld [vmem:[%s1 + $0x24] sm:$0xf]
        %v311 = vld [vmem:[%s1 + $0x28] sm:$0xf]
        %v312 = vld [vmem:[%s1 + $0x2c] sm:$0xf]
        %v313 = vld [vmem:[%s1 + $0x30] sm:$0xf]
        %v314 = vld [vmem:[%s1 + $0x34] sm:$0xf]
        %v315 = vld [vmem:[%s1 + $0x38] sm:$0xf]
        %v316 = vld [vmem:[%s1 + $0x3c] sm:$0xf]
        %v317 = vld [vmem:[%s2] sm:$0xff]
        %v318 = vld [vmem:[%s2 + $0x8] sm:$0xff]
        %v319 = vld [vmem:[%s2 + $0x10] sm:$0xff]
        %v320 = vld [vmem:[%s2 + $0x18] sm:$0xff]
        %v321 = vld [vmem:[%s2 + $0x20] sm:$0xff]
        %v322 = vld [vmem:[%s2 + $0x28] sm:$0xff]
        %v323 = vld [vmem:[%s2 + $0x30] sm:$0xff]
        %v324 = vld [vmem:[%s2 + $0x38] sm:$0xff]
        %v325 = vld [vmem:[%s2 + $0x40] sm:$0xff]
        %v326 = vld [vmem:[%s2 + $0x48] sm:$0xff]
        %v327 = vld [vmem:[%s2 + $0x50] sm:$0xff]
        %v328 = vld [vmem:[%s2 + $0x58] sm:$0xff]
        %v329 = vld [vmem:[%s2 + $0x60] sm:$0xff]
        %v330 = vld [vmem:[%s2 + $0x68] sm:$0xff]
        %v331 = vld [vmem:[%s2 + $0x70] sm:$0xff]
        %v332 = vld [vmem:[%s2 + $0x78] sm:$0xff]
        %334 = vset.pattern.permute.xlu0 0
        %335 = vperm.xlu0 %334, %v317
        %v336 = vpop.permute.xlu0 %335
        %339 = vset.pattern.permute.xlu0 0
        %340 = vperm.xlu0 %339, %v318
        %v341 = vpop.permute.xlu0 %340
        %344 = vset.pattern.permute.xlu0 0
        %345 = vperm.xlu0 %344, %v319
        %v346 = vpop.permute.xlu0 %345
        %349 = vset.pattern.permute.xlu0 0
        %350 = vperm.xlu0 %349, %v320
        %v351 = vpop.permute.xlu0 %350
        %354 = vset.pattern.permute.xlu0 0
        %355 = vperm.xlu0 %354, %v321
        %v356 = vpop.permute.xlu0 %355
        %359 = vset.pattern.permute.xlu0 0
        %360 = vperm.xlu0 %359, %v322
        %v361 = vpop.permute.xlu0 %360
        %364 = vset.pattern.permute.xlu0 0
        %365 = vperm.xlu0 %364, %v323
        %v366 = vpop.permute.xlu0 %365
        %369 = vset.pattern.permute.xlu0 0
        %370 = vperm.xlu0 %369, %v324
        %v371 = vpop.permute.xlu0 %370
        %374 = vset.pattern.permute.xlu0 0
        %375 = vperm.xlu0 %374, %v325
        %v376 = vpop.permute.xlu0 %375
        %379 = vset.pattern.permute.xlu0 0
        %380 = vperm.xlu0 %379, %v326
        %v381 = vpop.permute.xlu0 %380
        %384 = vset.pattern.permute.xlu0 0
        %385 = vperm.xlu0 %384, %v327
        %v386 = vpop.permute.xlu0 %385
        %389 = vset.pattern.permute.xlu0 0
        %390 = vperm.xlu0 %389, %v328
        %v391 = vpop.permute.xlu0 %390
        %394 = vset.pattern.permute.xlu0 0
        %395 = vperm.xlu0 %394, %v329
        %v396 = vpop.permute.xlu0 %395
        %399 = vset.pattern.permute.xlu0 0
        %400 = vperm.xlu0 %399, %v330
        %v401 = vpop.permute.xlu0 %400
        %404 = vset.pattern.permute.xlu0 0
        %405 = vperm.xlu0 %404, %v331
        %v406 = vpop.permute.xlu0 %405
        %409 = vset.pattern.permute.xlu0 0
        %410 = vperm.xlu0 %409, %v332
        %v411 = vpop.permute.xlu0 %410
        %v429 = vunpack.c.l.b16 %v301
        %v430 = vunpack.c.l.b16 %v302
        %v431 = vunpack.c.l.b16 %v303
        %v432 = vunpack.c.l.b16 %v304
        %v433 = vunpack.c.l.b16 %v305
        %v434 = vunpack.c.l.b16 %v306
        %v435 = vunpack.c.l.b16 %v307
        %v436 = vunpack.c.l.b16 %v308
        %v437 = vunpack.c.l.b16 %v309
        %v438 = vunpack.c.l.b16 %v310
        %v439 = vunpack.c.l.b16 %v311
        %v440 = vunpack.c.l.b16 %v312
        %v441 = vunpack.c.l.b16 %v313
        %v442 = vunpack.c.l.b16 %v314
        %v443 = vunpack.c.l.b16 %v315
        %v444 = vunpack.c.l.b16 %v316
        %v445 = vpack.c.b16 %v430, %v429
        %v446 = vpack.c.b16 %v432, %v431
        %v447 = vpack.c.b16 %v434, %v433
        %v448 = vpack.c.b16 %v436, %v435
        %v449 = vpack.c.b16 %v438, %v437
        %v450 = vpack.c.b16 %v440, %v439
        %v451 = vpack.c.b16 %v442, %v441
        %v452 = vpack.c.b16 %v444, %v443
        %vm453 = vcmask 31744
        %v455 = vsel %vm453, %v445, 0
        %v458 = vsel %vm453, %v446, 0
        %v461 = vsel %vm453, %v447, 0
        %v464 = vsel %vm453, %v448, 0
        %v467 = vsel %vm453, %v449, 0
        %v470 = vsel %vm453, %v450, 0
        %v473 = vsel %vm453, %v451, 0
        %v476 = vsel %vm453, %v452, 0
        %vm478 = vcmask 1041408
        %v480 = vsel %vm478, %v298, 0
        %482 = vmatprep.subr.bf16.mxu0 0
        %483 = vmatpush1.bf16.msra.mxu0 %v480
        %484 = vmatprep.subr.bf16.mxu0 0
        %485 = vmatpush1.bf16.msra.mxu0 0
        %486 = vmatprep.subr.bf16.mxu0 0
        %487 = vmatpush1.bf16.msra.mxu0 0
        %488 = vmatprep.subr.bf16.mxu0 0
        %489 = vmatpush1.bf16.msra.mxu0 0
        %490 = vmatprep.subr.bf16.mxu0 0
        %491 = vmatpush1.bf16.msra.mxu0 0
        %492 = vmatprep.subr.bf16.mxu0 0
        %493 = vmatpush1.bf16.msra.mxu0 0
        %494 = vmatprep.subr.bf16.mxu0 0
        %495 = vmatpush1.bf16.msra.mxu0 0
        %496 = vmatprep.subr.bf16.mxu0 0
        %497 = vmatpush1.bf16.msra.mxu0 0
        %498 = vmatprep.subr.bf16.mxu0 0
        %499 = vmatpush1.bf16.msra.mxu0 0
        %500 = vmatprep.subr.bf16.mxu0 0
        %501 = vmatpush1.bf16.msra.mxu0 0
        %502 = vmatprep.subr.bf16.mxu0 0
        %503 = vmatpush1.bf16.msra.mxu0 0
        %504 = vmatprep.subr.bf16.mxu0 0
        %505 = vmatpush1.bf16.msra.mxu0 0
        %506 = vmatprep.subr.bf16.mxu0 0
        %507 = vmatpush1.bf16.msra.mxu0 0
        %508 = vmatprep.subr.bf16.mxu0 0
        %509 = vmatpush1.bf16.msra.mxu0 0
        %510 = vmatprep.subr.bf16.mxu0 0
        %511 = vmatpush1.bf16.msra.mxu0 0
        %512 = vmatprep.subr.bf16.mxu0 0
        %513 = vmatpush1.bf16.msra.mxu0 0
        %514 = vmatprep.mubr.bf16.mxu0 0
        %515 = vmatmul.mubr.bf16.gmra.mrb[0].mxu0 %v455
        %v516 = vpop.f32.mrb[0].mxu0
        %v517 = vadd.f32 %v336, %v516
        %v518 = vpop.f32.mrb[0].mxu0
        %v519 = vpop.f32.mrb[0].mxu0
        %v520 = vadd.f32 %v341, %v519
        %v521 = vpop.f32.mrb[0].mxu0
        %522 = vmatprep.mubr.bf16.mxu0 0
        %523 = vmatmul.mubr.bf16.gmra.mrb[0].mxu0 %v458
        %v524 = vpop.f32.mrb[0].mxu0
        %v525 = vadd.f32 %v346, %v524
        %v526 = vpop.f32.mrb[0].mxu0
        %v527 = vpop.f32.mrb[0].mxu0
        %v528 = vadd.f32 %v351, %v527
        %v529 = vpop.f32.mrb[0].mxu0
        %530 = vmatprep.mubr.bf16.mxu0 0
        %531 = vmatmul.mubr.bf16.gmra.mrb[0].mxu0 %v461
        %v532 = vpop.f32.mrb[0].mxu0
        %v533 = vadd.f32 %v356, %v532
        %v534 = vpop.f32.mrb[0].mxu0
        %v535 = vpop.f32.mrb[0].mxu0
        %v536 = vadd.f32 %v361, %v535
        %v537 = vpop.f32.mrb[0].mxu0
        %538 = vmatprep.mubr.bf16.mxu0 0
        %539 = vmatmul.mubr.bf16.gmra.mrb[0].mxu0 %v464
        %v540 = vpop.f32.mrb[0].mxu0
        %v541 = vadd.f32 %v366, %v540
        %v542 = vpop.f32.mrb[0].mxu0
        %v543 = vpop.f32.mrb[0].mxu0
        %v544 = vadd.f32 %v371, %v543
        %v545 = vpop.f32.mrb[0].mxu0
        %546 = vmatprep.mubr.bf16.mxu0 0
        %547 = vmatmul.mubr.bf16.gmra.mrb[0].mxu0 %v467
        %v548 = vpop.f32.mrb[0].mxu0
        %v549 = vadd.f32 %v376, %v548
        %v550 = vpop.f32.mrb[0].mxu0
        %v551 = vpop.f32.mrb[0].mxu0
        %v552 = vadd.f32 %v381, %v551
        %v553 = vpop.f32.mrb[0].mxu0
        %554 = vmatprep.mubr.bf16.mxu0 0
        %555 = vmatmul.mubr.bf16.gmra.mrb[0].mxu0 %v470
        %v556 = vpop.f32.mrb[0].mxu0
        %v557 = vadd.f32 %v386, %v556
        %v558 = vpop.f32.mrb[0].mxu0
        %v559 = vpop.f32.mrb[0].mxu0
        %v560 = vadd.f32 %v391, %v559
        %v561 = vpop.f32.mrb[0].mxu0
        %562 = vmatprep.mubr.bf16.mxu0 0
        %563 = vmatmul.mubr.bf16.gmra.mrb[0].mxu0 %v473
        %v564 = vpop.f32.mrb[0].mxu0
        %v565 = vadd.f32 %v396, %v564
        %v566 = vpop.f32.mrb[0].mxu0
        %v567 = vpop.f32.mrb[0].mxu0
        %v568 = vadd.f32 %v401, %v567
        %v569 = vpop.f32.mrb[0].mxu0
        %570 = vmatprep.mubr.bf16.mxu0 0
        %571 = vmatmul.mubr.bf16.gmra.mrb[0].mxu0 %v476
        %v572 = vpop.f32.mrb[0].mxu0
        %v573 = vadd.f32 %v406, %v572
        %v574 = vpop.f32.mrb[0].mxu0
        %v575 = vpop.f32.mrb[0].mxu0
        %v576 = vadd.f32 %v411, %v575
        %v577 = vpop.f32.mrb[0].mxu0
        %578 = vdwg.mxu0
        %v579 = vmax.f32 %v517, 0.0
        %v580 = vmax.f32 %v520, 0.0
        %v581 = vmax.f32 %v525, 0.0
        %v582 = vmax.f32 %v528, 0.0
        %v583 = vmax.f32 %v533, 0.0
        %v584 = vmax.f32 %v536, 0.0
        %v585 = vmax.f32 %v541, 0.0
        %v586 = vmax.f32 %v544, 0.0
        %v587 = vmax.f32 %v549, 0.0
        %v588 = vmax.f32 %v552, 0.0
        %v589 = vmax.f32 %v557, 0.0
        %v590 = vmax.f32 %v560, 0.0
        %v591 = vmax.f32 %v565, 0.0
        %v592 = vmax.f32 %v568, 0.0
        %v593 = vmax.f32 %v573, 0.0
        %v594 = vmax.f32 %v576, 0.0
        %v595 = vpack.c.bf16 %v580, %v579
        %v596 = vpack.c.bf16 %v582, %v581
        %v597 = vpack.c.bf16 %v584, %v583
        %v598 = vpack.c.bf16 %v586, %v585
        %v599 = vpack.c.bf16 %v588, %v587
        %v600 = vpack.c.bf16 %v590, %v589
        %v601 = vpack.c.bf16 %v592, %v591
        %v602 = vpack.c.bf16 %v594, %v593
        %v603 = vld [vmem:[%s3] sm:$0xf]
        %v604 = vld [vmem:[%s3 + $0x4] sm:$0xf]
        %v605 = vld [vmem:[%s3 + $0x8] sm:$0xf]
        %v606 = vld [vmem:[%s3 + $0xc] sm:$0xf]
        %v607 = vld [vmem:[%s4] sm:$0xff]
        %v608 = vld [vmem:[%s4 + $0x8] sm:$0xff]
        %v609 = vld [vmem:[%s4 + $0x10] sm:$0xff]
        %v610 = vld [vmem:[%s4 + $0x18] sm:$0xff]
        %612 = vset.pattern.permute.xlu0 0
        %613 = vperm.xlu0 %612, %v607
        %v614 = vpop.permute.xlu0 %613
        %617 = vset.pattern.permute.xlu0 0
        %618 = vperm.xlu0 %617, %v608
        %v619 = vpop.permute.xlu0 %618
        %622 = vset.pattern.permute.xlu0 0
        %623 = vperm.xlu0 %622, %v609
        %v624 = vpop.permute.xlu0 %623
        %627 = vset.pattern.permute.xlu0 0
        %628 = vperm.xlu0 %627, %v610
        %v629 = vpop.permute.xlu0 %628
        %v635 = vunpack.c.l.b16 %v603
        %v636 = vunpack.c.l.b16 %v604
        %v637 = vunpack.c.l.b16 %v605
        %v638 = vunpack.c.l.b16 %v606
        %v639 = vpack.c.b16 %v636, %v635
        %v640 = vpack.c.b16 %v638, %v637
        %643 = vmatprep.subr.bf16.mxu0 0
        %644 = vmatpush1.bf16.msra.mxu0 %v595
        %645 = vmatprep.subr.bf16.mxu0 0
        %646 = vmatpush1.bf16.msra.mxu0 %v596
        %647 = vmatprep.subr.bf16.mxu0 0
        %648 = vmatpush1.bf16.msra.mxu0 %v597
        %649 = vmatprep.subr.bf16.mxu0 0
        %650 = vmatpush1.bf16.msra.mxu0 %v598
        %651 = vmatprep.subr.bf16.mxu0 0
        %652 = vmatpush1.bf16.msra.mxu0 %v599
        %653 = vmatprep.subr.bf16.mxu0 0
        %654 = vmatpush1.bf16.msra.mxu0 %v600
        %655 = vmatprep.subr.bf16.mxu0 0
        %656 = vmatpush1.bf16.msra.mxu0 %v601
        %657 = vmatprep.subr.bf16.mxu0 0
        %658 = vmatpush1.bf16.msra.mxu0 %v602
        %659 = vmatprep.subr.bf16.mxu0 0
        %660 = vmatpush1.bf16.msra.mxu0 0
        %661 = vmatprep.subr.bf16.mxu0 0
        %662 = vmatpush1.bf16.msra.mxu0 0
        %663 = vmatprep.subr.bf16.mxu0 0
        %664 = vmatpush1.bf16.msra.mxu0 0
        %665 = vmatprep.subr.bf16.mxu0 0
        %666 = vmatpush1.bf16.msra.mxu0 0
        %667 = vmatprep.subr.bf16.mxu0 0
        %668 = vmatpush1.bf16.msra.mxu0 0
        %669 = vmatprep.subr.bf16.mxu0 0
        %670 = vmatpush1.bf16.msra.mxu0 0
        %671 = vmatprep.subr.bf16.mxu0 0
        %672 = vmatpush1.bf16.msra.mxu0 0
        %673 = vmatprep.subr.bf16.mxu0 0
        %674 = vmatpush1.bf16.msra.mxu0 0
        %675 = vmatprep.mubr.bf16.mxu0 0
        %676 = vmatmul.mubr.bf16.gmra.mrb[0].mxu0 %v639
        %v677 = vpop.f32.mrb[0].mxu0
        %v678 = vadd.f32 %v614, %v677
        %v679 = vpop.f32.mrb[0].mxu0
        %v680 = vpop.f32.mrb[0].mxu0
        %v681 = vadd.f32 %v619, %v680
        %v682 = vpop.f32.mrb[0].mxu0
        %683 = vmatprep.mubr.bf16.mxu0 0
        %684 = vmatmul.mubr.bf16.gmra.mrb[0].mxu0 %v640
        %v685 = vpop.f32.mrb[0].mxu0
        %v686 = vadd.f32 %v624, %v685
        %v687 = vpop.f32.mrb[0].mxu0
        %v688 = vpop.f32.mrb[0].mxu0
        %v689 = vadd.f32 %v629, %v688
        %v690 = vpop.f32.mrb[0].mxu0
        %691 = vdwg.mxu0
        %v692 = vlaneseq
        %v693 = vshrl.u32 %v692, 7
        %v694 = vsub.s32 3, %v693
        %v695 = vrot.slane %v300, %v694
        %v696 = vmul.f32 %v678, %v695
        %v697 = vmul.f32 %v681, %v695
        %v698 = vmul.f32 %v686, %v695
        %v699 = vmul.f32 %v689, %v695
        %v700 = vpack.c.bf16 %v697, %v696
        %v701 = vpack.c.bf16 %v699, %v698
        %v702 = vld [vmem:[%s287] sm:$0xff]
        %v703 = vld [vmem:[%s287 + $0x8] sm:$0xff]
        %v706 = vunpack.c.l.b16 %v296
        %v707 = vunpack.c.l.b16 %v297
        %v708 = vpack.c.b16 %v707, %v706
        %710 = vmatprep.subr.bf16.mxu0 0
        %711 = vmatpush1.bf16.xpose.msra.mxu0 %v700
        %712 = vmatprep.subr.bf16.mxu0 0
        %713 = vmatpush1.bf16.xpose.msra.mxu0 %v701
        %714 = vmatprep.subr.bf16.mxu0 0
        %715 = vmatpush1.bf16.xpose.msra.mxu0 0
        %716 = vmatprep.subr.bf16.mxu0 0
        %717 = vmatpush1.bf16.xpose.msra.mxu0 0
        %718 = vmatprep.subr.bf16.mxu0 0
        %719 = vmatpush1.bf16.xpose.msra.mxu0 0
        %720 = vmatprep.subr.bf16.mxu0 0
        %721 = vmatpush1.bf16.xpose.msra.mxu0 0
        %722 = vmatprep.subr.bf16.mxu0 0
        %723 = vmatpush1.bf16.xpose.msra.mxu0 0
        %724 = vmatprep.subr.bf16.mxu0 0
        %725 = vmatpush1.bf16.xpose.msra.mxu0 0
        %726 = vmatprep.subr.bf16.mxu0 0
        %727 = vmatpush1.bf16.xpose.msra.mxu0 0
        %728 = vmatprep.subr.bf16.mxu0 0
        %729 = vmatpush1.bf16.xpose.msra.mxu0 0
        %730 = vmatprep.subr.bf16.mxu0 0
        %731 = vmatpush1.bf16.xpose.msra.mxu0 0
        %732 = vmatprep.subr.bf16.mxu0 0
        %733 = vmatpush1.bf16.xpose.msra.mxu0 0
        %734 = vmatprep.subr.bf16.mxu0 0
        %735 = vmatpush1.bf16.xpose.msra.mxu0 0
        %736 = vmatprep.subr.bf16.mxu0 0
        %737 = vmatpush1.bf16.xpose.msra.mxu0 0
        %738 = vmatprep.subr.bf16.mxu0 0
        %739 = vmatpush1.bf16.xpose.msra.mxu0 0
        %740 = vmatprep.subr.bf16.mxu0 0
        %741 = vmatpush1.bf16.xpose.msra.mxu0 0
        %742 = vmatprep.mubr.bf16.mxu0 0
        %743 = vmatmul.mubr.bf16.gmra.mrb[0].mxu0 %v708
        %v744 = vpop.f32.mrb[0].mxu0
        %v745 = vadd.f32 0.0, %v744
        %v746 = vpop.f32.mrb[0].mxu0
        %v747 = vpop.f32.mrb[0].mxu0
        %v748 = vadd.f32 0.0, %v747
        %v749 = vpop.f32.mrb[0].mxu0
        %750 = vdwg.mxu0
        %v751 = vadd.f32 %v702, %v745
        %v752 = vadd.f32 %v703, %v748
        %vm753 = vcmask 261120
        %754 = vst.msk [vmem:[%s287] sm:$0xff] %vm753, %v751
        %755 = vst.msk [vmem:[%s287 + $0x8] sm:$0xff] %vm753, %v752
        %s756 = sand.u32 %s151, 1
        %s757 = scalar_lea.sflag [#allocation4], %s756
        %s758 = sand.u32 %s151, 1
        %s759 = smul.addr %s758, 16
        %s760 = scalar_lea.vmem [#allocation3], %s759
        // Predicated region
        $region86: #{tpu_custom_call.1} parent=76 // pred_check
          %p761 = pneg %p161
        $region87: #{tpu_custom_call.1} parent=76 // pred_check_branch
          %763 = sbr.rel (%p761) target = $region89
        $region88: #{tpu_custom_call.1} parent=76 // pred_region
          %s765 = ssub.s32 256, 256
          %766 = vsyncadd %s757, %s765
          %s767 = smul.addr %s23, 2
          %s768 = smul.addr %s767, 128
          %s769 = scalar_lea.hbm %s5, %s768
          %s770 = sshll.u32 %s760, 4
          %s771 = int_to_ptr.vmem [resolvable:$true] %s770
          %776 = dma.vmem_to_hbm [thread:$0]  %s771, 256, %s769, %s757, 128, 128, 8
        $region89: #{tpu_custom_call.1} parent=76 // pred_fallthru
          _
      $region77: #{tpu_custom_call.1} parent=5 // pred_fallthru
        _
      %p777 = scmp.le.s32.totalorder 2, %s14
      // Predicated region
      $region90: #{tpu_custom_call.1} parent=5 // pred_check
        %p778 = pneg %p777
      $region91: #{tpu_custom_call.1} parent=5 // pred_check_branch
        %780 = sbr.rel (%p778) target = $region93
      $region92: #{tpu_custom_call.1} parent=5 // pred_region
        %s781 = ssub.s32 %s14, 2
        // Predicated region
        $region94: #{tpu_custom_call.1} parent=92 // pred_check
          %p782 = pneg %p167
        $region95: #{tpu_custom_call.1} parent=92 // pred_check_branch
          %784 = sbr.rel (%p782) target = $region97
        $region96: #{tpu_custom_call.1} parent=92 // pred_region
          %s785 = sand.u32 %s152, 1
          %s786 = scalar_lea.sflag [#allocation4], %s785
          %s787 = sand.u32 %s152, 1
          %s788 = smul.addr %s787, 16
          %s789 = scalar_lea.vmem [#allocation3], %s788
          %790 = dma.done %s786, 256
        $region97: #{tpu_custom_call.1} parent=92 // pred_fallthru
          _
      $region93: #{tpu_custom_call.1} parent=5 // pred_fallthru
        _
    $region6: #{tpu_custom_call.1} parent=1 // loop_footer
      %s18 = sadd.s32 1, %s14
    $region7: #{tpu_custom_call.1} parent=1 // loop_footer_branch
      %13 = sbr.rel target = $region3
    $region8: #{tpu_custom_call.1} parent=1 // loop_exit
      _
    %791 = vsyncpa [#allocation4], 1
    %s792 = scalar_lea.sflag [#allocation4], 1
    %793 = vsyncpa %s792, 1

</llo_original>
